<compile_context>
chip_gen: v6e
topology: v6e:2x2x1
jax: 0.10.0
libtpu: 0.0.40
codegen_flags: <defaults>
</compile_context>

<pallas_src>
import functools

import jax
import jax.numpy as jnp
from jax.experimental import pallas as pl
from jax.experimental.pallas import tpu as pltpu


def paws_head_kernel(tok1_ref, mask1_ref, tok2_ref, mask2_ref,
                     w_t_ref, b_ref, labels_ref,
                     logits_ref, nll_ref, *, d_model, num_labels):
    """One batch tile: pooled embeddings -> padded logits + per-row NLL."""
    D = d_model

    def pooled_normalized(tok_ref, mask_ref):
        tok = tok_ref[...]                       # (Bt, S, D)   bf16
        mask = mask_ref[...]                     # (Bt, 1, S)   bf16
        # Masked sum over S on the MXU: (Bt,1,S) @ (Bt,S,D) -> (Bt,1,D), f32 acc.
        sum_emb3 = jnp.einsum('bqs,bsd->bqd', mask, tok,
                              preferred_element_type=jnp.float32)
        sum_emb = jnp.sum(sum_emb3, axis=1)      # (Bt, D)  (drops the unit axis)
        # sum of mask over S (exact: mask is 0/1), as (Bt, 1).
        m_f32 = jnp.sum(mask.astype(jnp.float32), axis=1)          # (Bt, S)
        sum_mask = jnp.sum(m_f32, axis=1, keepdims=True)           # (Bt, 1)
        # clamp(min=1e-9) then multiply by reciprocal (EUP). The approx error
        # cancels exactly in the L2-normalize below (uniform positive scale).
        inv_mask = pl.reciprocal(jnp.maximum(sum_mask, 1e-9), approx=True)
        emb = sum_emb * inv_mask                                    # (Bt, D)
        # F.normalize(p=2, dim=1): x * rsqrt(max(||x||^2, eps^2)), eps=1e-12.
        sumsq = jnp.sum(emb * emb, axis=1, keepdims=True)
        inv_norm = jax.lax.rsqrt(jnp.maximum(sumsq, 1e-24))
        return emb * inv_norm                                       # (Bt, D) f32

    u = pooled_normalized(tok1_ref, mask1_ref)
    v = pooled_normalized(tok2_ref, mask2_ref)

    # Head: split the concat-matmul into three K-chunk matmuls (no concat copy).
    logits = (jnp.dot(u, w_t_ref[0:D, :], preferred_element_type=jnp.float32)
              + jnp.dot(v, w_t_ref[D:2 * D, :], preferred_element_type=jnp.float32)
              + jnp.dot(jnp.abs(u - v), w_t_ref[2 * D:3 * D, :],
                        preferred_element_type=jnp.float32)
              + b_ref[...])                                         # (Bt, L_pad)
    logits_ref[...] = logits                                        # lane-dense store

    # Cross-entropy per row (mean over batch is done in the wrapper).
    col = jax.lax.broadcasted_iota(jnp.int32, logits.shape, 1)      # (Bt, L_pad)
    valid = col < num_labels
    masked = jnp.where(valid, logits, -1e30)                        # ignore pad lanes
    lmax = jnp.max(masked, axis=1, keepdims=True)
    lse = jnp.log(jnp.sum(jnp.exp(masked - lmax), axis=1, keepdims=True)) + lmax
    labels = labels_ref[...]                                        # (Bt, 1) int32
    onehot = (col == labels).astype(jnp.float32)                    # pad lanes never match
    correct = jnp.sum(logits * onehot, axis=1, keepdims=True)
    nll_ref[...] = lse - correct                                    # (Bt, 1)


def paws_forward(tok1, mask1, tok2, mask2, head_w, head_b, labels,
                 *, b_tile=None, compute_dtype=jnp.bfloat16):
    """head_w: (L, 3D) like nn.Linear.weight, head_b: (L,). Returns (loss, logits)."""
    B, S, D = tok1.shape
    L = head_w.shape[0]
    L_pad = ((L + 127) // 128) * 128            # lane-dense logits slab

    if b_tile is None:
        b_tile = B if B <= 8 else 8             # TODO(synk): halve on v7x / raise on v6e
    assert B % b_tile == 0, "batch must be divisible by the batch tile"
    grid_b = B // b_tile

    # Pad head params with zeros to L_pad (padded lanes are masked in-kernel and
    # sliced off in the wrapper).
    w_t = jnp.zeros((3 * D, L_pad), jnp.float32).at[:, :L].set(
        head_w.astype(jnp.float32).T)
    b_pad = jnp.zeros((1, L_pad), jnp.float32).at[0, :L].set(
        head_b.astype(jnp.float32).reshape(-1))

    # bf16 activations (f32 accumulation inside the kernel). Mask reshaped to
    # (B, 1, S) in the wrapper so the kernel needs no relayout before the einsum.
    tok1_c = tok1.astype(compute_dtype)
    tok2_c = tok2.astype(compute_dtype)
    m1 = mask1.reshape(B, 1, S).astype(compute_dtype)
    m2 = mask2.reshape(B, 1, S).astype(compute_dtype)
    labels2d = labels.reshape(B, 1).astype(jnp.int32)
    # TODO(synk): labels could be a scalar-prefetch SMEM arg; kept as a tiny VMEM
    # block for simplicity.

    kernel = functools.partial(paws_head_kernel, d_model=D, num_labels=L)

    logits_pad, nll = pl.pallas_call(
        kernel,
        grid=(grid_b,),
        out_shape=(
            jax.ShapeDtypeStruct((B, L_pad), jnp.float32),   # padded logits
            jax.ShapeDtypeStruct((B, 1), jnp.float32),       # per-row NLL
        ),
        in_specs=[
            pl.BlockSpec((b_tile, S, D), lambda i: (i, 0, 0)),   # tok1
            pl.BlockSpec((b_tile, 1, S), lambda i: (i, 0, 0)),   # mask1
            pl.BlockSpec((b_tile, S, D), lambda i: (i, 0, 0)),   # tok2
            pl.BlockSpec((b_tile, 1, S), lambda i: (i, 0, 0)),   # mask2
            pl.BlockSpec((3 * D, L_pad), lambda i: (0, 0)),      # w_t (replicated)
            pl.BlockSpec((1, L_pad), lambda i: (0, 0)),          # bias (replicated)
            pl.BlockSpec((b_tile, 1), lambda i: (i, 0)),         # labels
        ],
        out_specs=(
            pl.BlockSpec((b_tile, L_pad), lambda i: (i, 0)),     # logits (lane-dense)
            pl.BlockSpec((b_tile, 1), lambda i: (i, 0)),         # nll
        ),
        compiler_params=pltpu.CompilerParams(
            dimension_semantics=("parallel",)),
    )(tok1_c, m1, tok2_c, m2, w_t, b_pad, labels2d)

    loss = jnp.mean(nll)                 # CrossEntropyLoss mean reduction (glue)
    logits = logits_pad[:, :L]
    return loss, logits


def synthetic_body(input_ids, emb_table):
    # TODO(synk): the real `body` is an arbitrary transformer encoder; here it is
    # a deterministic embedding lookup stand-in (glue, not the kernel hot path).
    # TODO(synk): at production sizes this gather could be fused into the kernel
    # via scalar-prefetched input_ids + a VMEM-resident embedding table.
    return emb_table[input_ids]          # (B, S, D)


if __name__ == "__main__":
    # Small shapes consistent with the module's forward.
    B, S, D = 2, 8, 32          # batch, seq len, d_model
    L = 2                       # num labels
    VOCAB = 50

    key = jax.random.PRNGKey(0)
    k_emb, k_ids1, k_ids2, k_w, k_b, k_lab = jax.random.split(key, 6)

    emb_table = jax.random.normal(k_emb, (VOCAB, D), dtype=jnp.float32) * 0.1

    input_ids1 = jax.random.randint(k_ids1, (B, S), 0, VOCAB)
    input_ids2 = jax.random.randint(k_ids2, (B, S), 0, VOCAB)
    attention_mask1 = jnp.ones((B, S), dtype=jnp.float32).at[:, S - 2:].set(0.0)
    attention_mask2 = jnp.ones((B, S), dtype=jnp.float32).at[:, S - 3:].set(0.0)
    labels = jax.random.randint(k_lab, (B,), 0, L)

    # Head parameters: nn.Linear(3*d_model, label) — weight (L, 3D), bias (L,).
    bound = 1.0 / jnp.sqrt(3.0 * D)
    head_w = jax.random.uniform(k_w, (L, 3 * D), minval=-bound, maxval=bound,
                                dtype=jnp.float32)
    head_b = jax.random.uniform(k_b, (L,), minval=-bound, maxval=bound,
                                dtype=jnp.float32)

    # Body (glue) + Pallas kernel (hot path).
    tok1 = synthetic_body(input_ids1, emb_table)
    tok2 = synthetic_body(input_ids2, emb_table)

    loss, logits = paws_forward(tok1, attention_mask1, tok2, attention_mask2,
                                head_w, head_b, labels)
    jax.block_until_ready((loss, logits))

    # Pure-JAX reference. The kernel casts token embeddings to bf16 at the call
    # boundary (f32 accumulation), so the reference uses the same quantization.
    tok1_q = tok1.astype(jnp.bfloat16).astype(jnp.float32)
    tok2_q = tok2.astype(jnp.bfloat16).astype(jnp.float32)

    def ref_pool(tok, mask):
        m = mask[:, :, None]
        emb = jnp.sum(tok * m, axis=1) / jnp.maximum(jnp.sum(m, axis=1), 1e-9)
        n = jnp.sqrt(jnp.sum(emb * emb, axis=1, keepdims=True))
        return emb / jnp.maximum(n, 1e-12)

    u = ref_pool(tok1_q, attention_mask1)
    v = ref_pool(tok2_q, attention_mask2)
    feat = jnp.concatenate([u, v, jnp.abs(u - v)], axis=1)
    logits_exp = feat @ head_w.T + head_b[None, :]
    logz = jax.nn.logsumexp(logits_exp, axis=1)
    loss_exp = jnp.mean(logz - logits_exp[jnp.arange(B), labels])

    # Tolerance covers MXU accumulation-order / reduced-precision f32 dot paths.
    assert jnp.allclose(logits, logits_exp, atol=2e-3, rtol=2e-3), (logits, logits_exp)
    assert jnp.allclose(loss, loss_exp, atol=2e-3, rtol=2e-3), (loss, loss_exp)

    print("KERNEL_OK")
</pallas_src>

<mosaic_0001>
module attributes {stable_mosaic.version = 11 : i64} {
  func.func @paws_head_kernel(%arg0: i32, %arg1: memref<2x8x32xbf16, #tpu.memory_space<vmem>>, %arg2: memref<2x1x8xbf16, #tpu.memory_space<vmem>>, %arg3: memref<2x8x32xbf16, #tpu.memory_space<vmem>>, %arg4: memref<2x1x8xbf16, #tpu.memory_space<vmem>>, %arg5: memref<96x128xf32, #tpu.memory_space<vmem>>, %arg6: memref<1x128xf32, #tpu.memory_space<vmem>>, %arg7: memref<2x1xi32, #tpu.memory_space<vmem>>, %arg8: memref<2x128xf32, #tpu.memory_space<vmem>>, %arg9: memref<2x1xf32, #tpu.memory_space<vmem>>) attributes {dimension_semantics = [#tpu.dimension_semantics<parallel>], iteration_bounds = array<i64: 1>, scalar_prefetch = 0 : i64, scratch_operands = 0 : i64, tpu.core_type = #tpu.core_type<tc>, window_params = [{transform_indices = @transform_0, window_bounds = array<i64: 2, 8, 32>}, {transform_indices = @transform_1, window_bounds = array<i64: 2, 1, 8>}, {transform_indices = @transform_2, window_bounds = array<i64: 2, 8, 32>}, {transform_indices = @transform_3, window_bounds = array<i64: 2, 1, 8>}, {pipeline_mode = #tpu.pipeline_mode<synchronous>, transform_indices = @transform_4, window_bounds = array<i64: 96, 128>}, {pipeline_mode = #tpu.pipeline_mode<synchronous>, transform_indices = @transform_5, window_bounds = array<i64: 1, 128>}, {transform_indices = @transform_6, window_bounds = array<i64: 2, 1>}, {transform_indices = @transform_7, window_bounds = array<i64: 2, 128>}, {transform_indices = @transform_8, window_bounds = array<i64: 2, 1>}]} {
    %c0 = arith.constant 0 : index
    %c0_0 = arith.constant 0 : index
    %c0_1 = arith.constant 0 : index
    %0 = vector.load %arg1[%c0, %c0_0, %c0_1] : memref<2x8x32xbf16, #tpu.memory_space<vmem>>, vector<2x8x32xbf16>
    %c0_2 = arith.constant 0 : index
    %c0_3 = arith.constant 0 : index
    %c0_4 = arith.constant 0 : index
    %1 = vector.load %arg2[%c0_2, %c0_3, %c0_4] : memref<2x1x8xbf16, #tpu.memory_space<vmem>>, vector<2x1x8xbf16>
    "tpu.trace_start"() <{level = 10 : i32, message = "bqs,bsd->bqd"}> : () -> ()
    %cst = arith.constant dense<0.000000e+00> : vector<2x1x32xf32>
    %2 = tpu.matmul %1, %0, %cst {dimension_numbers = #tpu.dot_dimension_numbers<[2], [1], [1], [2], [0, 0, 0, 1, 1, 2], [0], [0]>} : vector<2x1x8xbf16>, vector<2x8x32xbf16>, vector<2x1x32xf32> -> vector<2x1x32xf32>
    "tpu.trace_stop"() : () -> ()
    %cst_5 = arith.constant dense<0.000000e+00> : vector<2x32xf32>
    %3 = vector.multi_reduction <add>, %2, %cst_5 [1] : vector<2x1x32xf32> to vector<2x32xf32>
    %4 = arith.extf %1 : vector<2x1x8xbf16> to vector<2x1x8xf32>
    %cst_6 = arith.constant dense<0.000000e+00> : vector<2x8xf32>
    %5 = vector.multi_reduction <add>, %4, %cst_6 [1] : vector<2x1x8xf32> to vector<2x8xf32>
    %cst_7 = arith.constant dense<0.000000e+00> : vector<2xf32>
    %6 = vector.multi_reduction <add>, %5, %cst_7 [1] : vector<2x8xf32> to vector<2xf32>
    %7 = vector.shape_cast %6 : vector<2xf32> to vector<2x1xf32>
    %cst_8 = arith.constant 9.99999971E-10 : f32
    %8 = vector.broadcast %cst_8 : f32 to vector<2x1xf32>
    %9 = arith.maximumf %7, %8 : vector<2x1xf32>
    %10 = tpu.reciprocal %9 {approx = true} : vector<2x1xf32> -> vector<2x1xf32>
    %11 = vector.broadcast %10 : vector<2x1xf32> to vector<2x32xf32>
    %12 = arith.mulf %3, %11 : vector<2x32xf32>
    %13 = arith.mulf %12, %12 : vector<2x32xf32>
    %cst_9 = arith.constant dense<0.000000e+00> : vector<2xf32>
    %14 = vector.multi_reduction <add>, %13, %cst_9 [1] : vector<2x32xf32> to vector<2xf32>
    %15 = vector.shape_cast %14 : vector<2xf32> to vector<2x1xf32>
    %cst_10 = arith.constant 1.000000e-24 : f32
    %16 = vector.broadcast %cst_10 : f32 to vector<2x1xf32>
    %17 = arith.maximumf %15, %16 : vector<2x1xf32>
    %18 = math.rsqrt %17 : vector<2x1xf32>
    %19 = vector.broadcast %18 : vector<2x1xf32> to vector<2x32xf32>
    %20 = arith.mulf %12, %19 : vector<2x32xf32>
    %c0_11 = arith.constant 0 : index
    %c0_12 = arith.constant 0 : index
    %c0_13 = arith.constant 0 : index
    %21 = vector.load %arg3[%c0_11, %c0_12, %c0_13] : memref<2x8x32xbf16, #tpu.memory_space<vmem>>, vector<2x8x32xbf16>
    %c0_14 = arith.constant 0 : index
    %c0_15 = arith.constant 0 : index
    %c0_16 = arith.constant 0 : index
    %22 = vector.load %arg4[%c0_14, %c0_15, %c0_16] : memref<2x1x8xbf16, #tpu.memory_space<vmem>>, vector<2x1x8xbf16>
    "tpu.trace_start"() <{level = 10 : i32, message = "bqs,bsd->bqd"}> : () -> ()
    %cst_17 = arith.constant dense<0.000000e+00> : vector<2x1x32xf32>
    %23 = tpu.matmul %22, %21, %cst_17 {dimension_numbers = #tpu.dot_dimension_numbers<[2], [1], [1], [2], [0, 0, 0, 1, 1, 2], [0], [0]>} : vector<2x1x8xbf16>, vector<2x8x32xbf16>, vector<2x1x32xf32> -> vector<2x1x32xf32>
    "tpu.trace_stop"() : () -> ()
    %cst_18 = arith.constant dense<0.000000e+00> : vector<2x32xf32>
    %24 = vector.multi_reduction <add>, %23, %cst_18 [1] : vector<2x1x32xf32> to vector<2x32xf32>
    %25 = arith.extf %22 : vector<2x1x8xbf16> to vector<2x1x8xf32>
    %cst_19 = arith.constant dense<0.000000e+00> : vector<2x8xf32>
    %26 = vector.multi_reduction <add>, %25, %cst_19 [1] : vector<2x1x8xf32> to vector<2x8xf32>
    %cst_20 = arith.constant dense<0.000000e+00> : vector<2xf32>
    %27 = vector.multi_reduction <add>, %26, %cst_20 [1] : vector<2x8xf32> to vector<2xf32>
    %28 = vector.shape_cast %27 : vector<2xf32> to vector<2x1xf32>
    %cst_21 = arith.constant 9.99999971E-10 : f32
    %29 = vector.broadcast %cst_21 : f32 to vector<2x1xf32>
    %30 = arith.maximumf %28, %29 : vector<2x1xf32>
    %31 = tpu.reciprocal %30 {approx = true} : vector<2x1xf32> -> vector<2x1xf32>
    %32 = vector.broadcast %31 : vector<2x1xf32> to vector<2x32xf32>
    %33 = arith.mulf %24, %32 : vector<2x32xf32>
    %34 = arith.mulf %33, %33 : vector<2x32xf32>
    %cst_22 = arith.constant dense<0.000000e+00> : vector<2xf32>
    %35 = vector.multi_reduction <add>, %34, %cst_22 [1] : vector<2x32xf32> to vector<2xf32>
    %36 = vector.shape_cast %35 : vector<2xf32> to vector<2x1xf32>
    %cst_23 = arith.constant 1.000000e-24 : f32
    %37 = vector.broadcast %cst_23 : f32 to vector<2x1xf32>
    %38 = arith.maximumf %36, %37 : vector<2x1xf32>
    %39 = math.rsqrt %38 : vector<2x1xf32>
    %40 = vector.broadcast %39 : vector<2x1xf32> to vector<2x32xf32>
    %41 = arith.mulf %33, %40 : vector<2x32xf32>
    %c0_24 = arith.constant 0 : index
    %c0_25 = arith.constant 0 : index
    %42 = vector.load %arg5[%c0_24, %c0_25] : memref<96x128xf32, #tpu.memory_space<vmem>>, vector<32x128xf32>
    %cst_26 = arith.constant dense<0.000000e+00> : vector<2x128xf32>
    %43 = tpu.matmul %20, %42, %cst_26 {dimension_numbers = #tpu.dot_dimension_numbers<[1], [0], [0], [1], [0, 0, 1, 1], [], []>} : vector<2x32xf32>, vector<32x128xf32>, vector<2x128xf32> -> vector<2x128xf32>
    %c32 = arith.constant 32 : index
    %c0_27 = arith.constant 0 : index
    %44 = vector.load %arg5[%c32, %c0_27] : memref<96x128xf32, #tpu.memory_space<vmem>>, vector<32x128xf32>
    %cst_28 = arith.constant dense<0.000000e+00> : vector<2x128xf32>
    %45 = tpu.matmul %41, %44, %cst_28 {dimension_numbers = #tpu.dot_dimension_numbers<[1], [0], [0], [1], [0, 0, 1, 1], [], []>} : vector<2x32xf32>, vector<32x128xf32>, vector<2x128xf32> -> vector<2x128xf32>
    %46 = arith.addf %43, %45 : vector<2x128xf32>
    %47 = arith.subf %20, %41 : vector<2x32xf32>
    %48 = math.absf %47 : vector<2x32xf32>
    %c64 = arith.constant 64 : index
    %c0_29 = arith.constant 0 : index
    %49 = vector.load %arg5[%c64, %c0_29] : memref<96x128xf32, #tpu.memory_space<vmem>>, vector<32x128xf32>
    %cst_30 = arith.constant dense<0.000000e+00> : vector<2x128xf32>
    %50 = tpu.matmul %48, %49, %cst_30 {dimension_numbers = #tpu.dot_dimension_numbers<[1], [0], [0], [1], [0, 0, 1, 1], [], []>} : vector<2x32xf32>, vector<32x128xf32>, vector<2x128xf32> -> vector<2x128xf32>
    %51 = arith.addf %46, %50 : vector<2x128xf32>
    %c0_31 = arith.constant 0 : index
    %c0_32 = arith.constant 0 : index
    %52 = vector.load %arg6[%c0_31, %c0_32] : memref<1x128xf32, #tpu.memory_space<vmem>>, vector<1x128xf32>
    %53 = vector.broadcast %52 : vector<1x128xf32> to vector<2x128xf32>
    %54 = arith.addf %51, %53 : vector<2x128xf32>
    %c0_33 = arith.constant 0 : index
    %c0_34 = arith.constant 0 : index
    %55 = vector.load %arg8[%c0_33, %c0_34] : memref<2x128xf32, #tpu.memory_space<vmem>>, vector<2x128xf32>
    tpu.vector_store %arg8[%c0_33, %c0_34], %54 {strides = array<i32>} : memref<2x128xf32, #tpu.memory_space<vmem>>, vector<2x128xf32>,
    %56 = tpu.iota {dimensions = array<i32: 1>} : vector<2x128xi32>
    %c2_i32 = arith.constant 2 : i32
    %57 = vector.broadcast %c2_i32 : i32 to vector<2x128xi32>
    %58 = arith.cmpi slt, %56, %57 : vector<2x128xi32>
    %cst_35 = arith.constant -1.000000e+30 : f32
    %59 = vector.broadcast %cst_35 : f32 to vector<2x128xf32>
    %60 = arith.select %58, %54, %59 : vector<2x128xi1>, vector<2x128xf32>
    %cst_36 = arith.constant dense<0xFF800000> : vector<2xf32>
    %61 = vector.multi_reduction <maximumf>, %60, %cst_36 [1] : vector<2x128xf32> to vector<2xf32>
    %62 = vector.shape_cast %61 : vector<2xf32> to vector<2x1xf32>
    %63 = vector.broadcast %62 : vector<2x1xf32> to vector<2x128xf32>
    %64 = arith.subf %60, %63 : vector<2x128xf32>
    %65 = math.exp %64 : vector<2x128xf32>
    %cst_37 = arith.constant dense<0.000000e+00> : vector<2xf32>
    %66 = vector.multi_reduction <add>, %65, %cst_37 [1] : vector<2x128xf32> to vector<2xf32>
    %67 = vector.shape_cast %66 : vector<2xf32> to vector<2x1xf32>
    %68 = math.log %67 : vector<2x1xf32>
    %69 = arith.addf %68, %62 : vector<2x1xf32>
    %c0_38 = arith.constant 0 : index
    %c0_39 = arith.constant 0 : index
    %70 = vector.load %arg7[%c0_38, %c0_39] : memref<2x1xi32, #tpu.memory_space<vmem>>, vector<2x1xi32>
    %71 = vector.broadcast %70 : vector<2x1xi32> to vector<2x128xi32>
    %72 = arith.cmpi eq, %56, %71 : vector<2x128xi32>
    %73 = arith.extui %72 : vector<2x128xi1> to vector<2x128xi32>
    %74 = arith.sitofp %73 : vector<2x128xi32> to vector<2x128xf32>
    %75 = arith.mulf %54, %74 : vector<2x128xf32>
    %cst_40 = arith.constant dense<0.000000e+00> : vector<2xf32>
    %76 = vector.multi_reduction <add>, %75, %cst_40 [1] : vector<2x128xf32> to vector<2xf32>
    %77 = vector.shape_cast %76 : vector<2xf32> to vector<2x1xf32>
    %78 = arith.subf %69, %77 : vector<2x1xf32>
    %c0_41 = arith.constant 0 : index
    %c0_42 = arith.constant 0 : index
    %79 = vector.load %arg9[%c0_41, %c0_42] : memref<2x1xf32, #tpu.memory_space<vmem>>, vector<2x1xf32>
    tpu.vector_store %arg9[%c0_41, %c0_42], %78 {strides = array<i32>} : memref<2x1xf32, #tpu.memory_space<vmem>>, vector<2x1xf32>,
    return
  }
  func.func @transform_0(%arg0: i32) -> (i32, i32, i32) {
    %c0_i32 = arith.constant 0 : i32
    %c0_i32_0 = arith.constant 0 : i32
    %c0_i32_1 = arith.constant 0 : i32
    return %arg0, %c0_i32, %c0_i32_0 : i32, i32, i32
  }
  func.func @transform_1(%arg0: i32) -> (i32, i32, i32) {
    %c0_i32 = arith.constant 0 : i32
    %c0_i32_0 = arith.constant 0 : i32
    %c0_i32_1 = arith.constant 0 : i32
    return %arg0, %c0_i32, %c0_i32_0 : i32, i32, i32
  }
  func.func @transform_2(%arg0: i32) -> (i32, i32, i32) {
    %c0_i32 = arith.constant 0 : i32
    %c0_i32_0 = arith.constant 0 : i32
    %c0_i32_1 = arith.constant 0 : i32
    return %arg0, %c0_i32, %c0_i32_0 : i32, i32, i32
  }
  func.func @transform_3(%arg0: i32) -> (i32, i32, i32) {
    %c0_i32 = arith.constant 0 : i32
    %c0_i32_0 = arith.constant 0 : i32
    %c0_i32_1 = arith.constant 0 : i32
    return %arg0, %c0_i32, %c0_i32_0 : i32, i32, i32
  }
  func.func @transform_4(%arg0: i32) -> (i32, i32) {
    %c0_i32 = arith.constant 0 : i32
    %c0_i32_0 = arith.constant 0 : i32
    %c0_i32_1 = arith.constant 0 : i32
    return %c0_i32, %c0_i32_0 : i32, i32
  }
  func.func @transform_5(%arg0: i32) -> (i32, i32) {
    %c0_i32 = arith.constant 0 : i32
    %c0_i32_0 = arith.constant 0 : i32
    %c0_i32_1 = arith.constant 0 : i32
    return %c0_i32, %c0_i32_0 : i32, i32
  }
  func.func @transform_6(%arg0: i32) -> (i32, i32) {
    %c0_i32 = arith.constant 0 : i32
    %c0_i32_0 = arith.constant 0 : i32
    return %arg0, %c0_i32 : i32, i32
  }
  func.func @transform_7(%arg0: i32) -> (i32, i32) {
    %c0_i32 = arith.constant 0 : i32
    %c0_i32_0 = arith.constant 0 : i32
    return %arg0, %c0_i32 : i32, i32
  }
  func.func @transform_8(%arg0: i32) -> (i32, i32) {
    %c0_i32 = arith.constant 0 : i32
    %c0_i32_0 = arith.constant 0 : i32
    return %arg0, %c0_i32 : i32, i32
  }
}

</mosaic_0001>

<llo_original>
// kernel: tpu_custom_call.1
$region0: #{tpu_custom_call.1}
  #allocation0 [shape = 'u32[]', space=smem, size = 0x4, offset = 0x4, fixed_abs, tag = 'smem constant byte address 0x4 - core index']
  #allocation1 [shape = 'u32[144,128]{1,0:T(1,128)}', space=vmem, size = 0x12000, scoped, tag = 'internal scratch']
  %s0 = inlined_call_operand.vmem [shape: bf16[2,8,32], index: 0, kind: input, shape index: {}]
  %s1 = inlined_call_operand.vmem [shape: bf16[2,1,8], index: 1, kind: input, shape index: {}]
  %s2 = inlined_call_operand.hbm [shape: bf16[2,8,32], index: 2, kind: input, shape index: {}]
  %s3 = inlined_call_operand.vmem [shape: bf16[2,1,8], index: 3, kind: input, shape index: {}]
  %s4 = inlined_call_operand.hbm [shape: f32[96,128], index: 4, kind: input, shape index: {}]
  %s5 = inlined_call_operand.vmem [shape: f32[1,128], index: 5, kind: input, shape index: {}]
  %s6 = inlined_call_operand.vmem [shape: s32[2,1], index: 6, kind: input, shape index: {}]
  %s7 = inlined_call_operand.hbm [shape: f32[2,128], index: 7, kind: output, shape index: {0}]
  %s8 = inlined_call_operand.vmem [shape: f32[2,1], index: 8, kind: output, shape index: {1}]
  %9 = xla_tuple %s7, %s8
  %s10 = sld [smem:[#allocation0]]
  $region54: #{tpu_custom_call.1} parent=0
    _
  %s12 = ssub.s32 1, %s10
  %s13 = scalar_select 0, %s12, %s10
  $region1: #{tpu_custom_call.1} parent=0
    #allocation2 [shape = 'u8[4096]{0}', space=vmem, size = 0x1000, scoped, tag = 'input window, operand 2, single buffered']
    #allocation3 [shape = 's32[1]{0}', space=sflag, size = 0x4, scoped, tag = 'scoped memory for tpu_custom_call.1']
    #allocation4 [shape = 's32[1]{0}', space=sflag, size = 0x4, scoped, tag = 'scoped memory for tpu_custom_call.1']
    #allocation5 [shape = 'u8[49152]{0}', space=vmem, size = 0xc000, scoped, tag = 'input window, operand 4, single buffered']
    #allocation6 [shape = 's32[1]{0}', space=sflag, size = 0x4, scoped, tag = 'scoped memory for tpu_custom_call.1']
    #allocation7 [shape = 'u8[1024]{0}', space=vmem, size = 0x400, scoped, tag = 'output window, operand 0, single buffered']
    %14 = vsyncpa [#allocation3], 0
    %15 = vsyncpa [#allocation6], 0
    %16 = vsyncpa [#allocation4], 0
    // Predicated region
    $region2: #{tpu_custom_call.1} parent=1 // pred_check
      _
    $region3: #{tpu_custom_call.1} parent=1 // pred_check_branch
      %18 = sbr.rel (0) target = $region5
    $region4: #{tpu_custom_call.1} parent=1 // pred_region
      _
    $region5: #{tpu_custom_call.1} parent=1 // pred_fallthru
      _
    // Predicated region
    $region6: #{tpu_custom_call.1} parent=1 // pred_check
      _
    $region7: #{tpu_custom_call.1} parent=1 // pred_check_branch
      %20 = sbr.rel (0) target = $region9
    $region8: #{tpu_custom_call.1} parent=1 // pred_region
      _
    $region9: #{tpu_custom_call.1} parent=1 // pred_fallthru
      _
    // Predicated region
    $region10: #{tpu_custom_call.1} parent=1 // pred_check
      _
    $region11: #{tpu_custom_call.1} parent=1 // pred_check_branch
      %22 = sbr.rel (0) target = $region13
    $region12: #{tpu_custom_call.1} parent=1 // pred_region
      %s24 = ssub.s32 128, 128
      %25 = vsyncadd [#allocation3], %s24
      %s26 = sshll.u32 [#allocation2], 4
      %s27 = int_to_ptr.vmem [resolvable:$true] %s26
      %32 = dma.hbm_to_vmem [thread:$0]  %s2, 128, %s27, [#allocation3], 64, 64, 4
    $region13: #{tpu_custom_call.1} parent=1 // pred_fallthru
      _
    // Predicated region
    $region14: #{tpu_custom_call.1} parent=1 // pred_check
      _
    $region15: #{tpu_custom_call.1} parent=1 // pred_check_branch
      %34 = sbr.rel (0) target = $region17
    $region16: #{tpu_custom_call.1} parent=1 // pred_region
      _
    $region17: #{tpu_custom_call.1} parent=1 // pred_fallthru
      _
    // Predicated region
    $region18: #{tpu_custom_call.1} parent=1 // pred_check
      _
    $region19: #{tpu_custom_call.1} parent=1 // pred_check_branch
      %36 = sbr.rel (0) target = $region21
    $region20: #{tpu_custom_call.1} parent=1 // pred_region
      %s38 = ssub.s32 1536, 1536
      %39 = vsyncadd [#allocation6], %s38
      %s40 = sshll.u32 [#allocation5], 4
      %s41 = int_to_ptr.vmem [resolvable:$true] %s40
      %46 = dma.hbm_to_vmem [thread:$0]  %s4, 1536, %s41, [#allocation6], 128, 128, 8
    $region21: #{tpu_custom_call.1} parent=1 // pred_fallthru
      _
    // Predicated region
    $region22: #{tpu_custom_call.1} parent=1 // pred_check
      _
    $region23: #{tpu_custom_call.1} parent=1 // pred_check_branch
      %48 = sbr.rel (0) target = $region25
    $region24: #{tpu_custom_call.1} parent=1 // pred_region
      _
    $region25: #{tpu_custom_call.1} parent=1 // pred_fallthru
      _
    // Predicated region
    $region26: #{tpu_custom_call.1} parent=1 // pred_check
      _
    $region27: #{tpu_custom_call.1} parent=1 // pred_check_branch
      %50 = sbr.rel (0) target = $region29
    $region28: #{tpu_custom_call.1} parent=1 // pred_region
      _
    $region29: #{tpu_custom_call.1} parent=1 // pred_fallthru
      _
    // Predicated region
    $region30: #{tpu_custom_call.1} parent=1 // pred_check
      _
    $region31: #{tpu_custom_call.1} parent=1 // pred_check_branch
      %52 = sbr.rel (0) target = $region33
    $region32: #{tpu_custom_call.1} parent=1 // pred_region
      %53 = dma.done [#allocation3], 128
    $region33: #{tpu_custom_call.1} parent=1 // pred_fallthru
      _
    // Predicated region
    $region34: #{tpu_custom_call.1} parent=1 // pred_check
      _
    $region35: #{tpu_custom_call.1} parent=1 // pred_check_branch
      %55 = sbr.rel (0) target = $region37
    $region36: #{tpu_custom_call.1} parent=1 // pred_region
      %56 = dma.done [#allocation6], 1536
    $region37: #{tpu_custom_call.1} parent=1 // pred_fallthru
      _
    %v58 = vld [vmem:[%s0] sm:$0xf]
    %v59 = vld [vmem:[%s0 + $0x4] sm:$0xf]
    %v60 = vld [vmem:[%s1] sm:$0x1]
    %v61 = vld [vmem:[%s1 + $0x1] sm:$0x1]
    %vm62 = vcmask 64512
    %v64 = vsel %vm62, %v60, 0
    %vm66 = vcmask 1043456
    %v68 = vsel %vm66, %v58, 0
    %70 = vmatprep.subr.bf16.mxu0 0
    %71 = vmatpush1.bf16.msra.mxu0 0
    %72 = vmatprep.subr.bf16.mxu0 0
    %73 = vmatpush1.bf16.msra.mxu0 0
    %74 = vmatprep.subr.bf16.mxu0 0
    %75 = vmatpush1.bf16.msra.mxu0 0
    %76 = vmatprep.subr.bf16.mxu0 0
    %77 = vmatpush1.bf16.msra.mxu0 0
    %78 = vmatprep.subr.bf16.mxu0 0
    %79 = vmatpush1.bf16.msra.mxu0 0
    %80 = vmatprep.subr.bf16.mxu0 0
    %81 = vmatpush1.bf16.msra.mxu0 0
    %82 = vmatprep.subr.bf16.mxu0 0
    %83 = vmatpush1.bf16.msra.mxu0 0
    %84 = vmatprep.subr.bf16.mxu0 0
    %85 = vmatpush1.bf16.msra.mxu0 %v68
    %86 = vmatprep.subr.bf16.mxu0 0
    %87 = vmatpush2.bf16.msra.mxu0 0
    %88 = vmatprep.subr.bf16.mxu0 0
    %89 = vmatpush2.bf16.msra.mxu0 0
    %90 = vmatprep.subr.bf16.mxu0 0
    %91 = vmatpush2.bf16.msra.mxu0 0
    %92 = vmatprep.subr.bf16.mxu0 0
    %93 = vmatpush2.bf16.msra.mxu0 0
    %94 = vmatprep.subr.bf16.mxu0 0
    %95 = vmatpush2.bf16.msra.mxu0 0
    %96 = vmatprep.subr.bf16.mxu0 0
    %97 = vmatpush2.bf16.msra.mxu0 0
    %98 = vmatprep.subr.bf16.mxu0 0
    %99 = vmatpush2.bf16.msra.mxu0 0
    %100 = vmatprep.subr.bf16.mxu0 0
    %101 = vmatpush2.bf16.msra.mxu0 0
    %102 = vmatprep.mubr.bf16.mxu0 0
    %103 = vmatmul.mubr.bf16.gmra.mxu0 %v64
    %v104 = vpop.f32.mrf.mxu0
    %v105 = vadd.f32 0.0, %v104
    %v106 = vpop.f32.mrf.mxu0
    %v107 = vpop.f32.mrf.mxu0
    %v108 = vpop.f32.mrf.mxu0
    %109 = vdwg.mxu0
    %v111 = vsel %vm62, %v61, 0
    %v114 = vsel %vm66, %v59, 0
    %116 = vmatprep.subr.bf16.mxu0 0
    %117 = vmatpush1.bf16.msra.mxu0 0
    %118 = vmatprep.subr.bf16.mxu0 0
    %119 = vmatpush1.bf16.msra.mxu0 0
    %120 = vmatprep.subr.bf16.mxu0 0
    %121 = vmatpush1.bf16.msra.mxu0 0
    %122 = vmatprep.subr.bf16.mxu0 0
    %123 = vmatpush1.bf16.msra.mxu0 0
    %124 = vmatprep.subr.bf16.mxu0 0
    %125 = vmatpush1.bf16.msra.mxu0 0
    %126 = vmatprep.subr.bf16.mxu0 0
    %127 = vmatpush1.bf16.msra.mxu0 0
    %128 = vmatprep.subr.bf16.mxu0 0
    %129 = vmatpush1.bf16.msra.mxu0 0
    %130 = vmatprep.subr.bf16.mxu0 0
    %131 = vmatpush1.bf16.msra.mxu0 %v114
    %132 = vmatprep.subr.bf16.mxu0 0
    %133 = vmatpush2.bf16.msra.mxu0 0
    %134 = vmatprep.subr.bf16.mxu0 0
    %135 = vmatpush2.bf16.msra.mxu0 0
    %136 = vmatprep.subr.bf16.mxu0 0
    %137 = vmatpush2.bf16.msra.mxu0 0
    %138 = vmatprep.subr.bf16.mxu0 0
    %139 = vmatpush2.bf16.msra.mxu0 0
    %140 = vmatprep.subr.bf16.mxu0 0
    %141 = vmatpush2.bf16.msra.mxu0 0
    %142 = vmatprep.subr.bf16.mxu0 0
    %143 = vmatpush2.bf16.msra.mxu0 0
    %144 = vmatprep.subr.bf16.mxu0 0
    %145 = vmatpush2.bf16.msra.mxu0 0
    %146 = vmatprep.subr.bf16.mxu0 0
    %147 = vmatpush2.bf16.msra.mxu0 0
    %148 = vmatprep.mubr.bf16.mxu0 0
    %149 = vmatmul.mubr.bf16.gmra.mxu0 %v111
    %v150 = vpop.f32.mrf.mxu0
    %v151 = vadd.f32 0.0, %v150
    %v152 = vpop.f32.mrf.mxu0
    %v153 = vpop.f32.mrf.mxu0
    %v154 = vpop.f32.mrf.mxu0
    %155 = vdwg.mxu0
    %v156 = vadd.f32 %v105, 0.0
    %v157 = vadd.f32 %v151, 0.0
    %v158 = vunpack.c.l.bf16 %v60
    %v159 = vunpack.c.l.bf16 %v61
    %v160 = vadd.f32 %v158, 0.0
    %v161 = vadd.f32 %v159, 0.0
    %v164 = vlaneseq
    %v165 = vshrl.u32 %v164, 7
    %v166 = vsub.s32 0, %v165
    %v167 = vrot.slane %v160, %v166
    %v168 = vlaneseq
    %v169 = vshrl.u32 %v168, 7
    %v170 = vsub.s32 0, %v169
    %v171 = vrot.slane %v161, %v170
    %vm172 = vcmask 1041409
    %v173 = vsel %vm172, %v171, %v167
    %vm175 = vcmask 58368
    %v176 = vsel %vm175, %v173, 0.0
    %177 = vadd.xlane.f32.xlu0 %v176
    %v178 = vpop.xlane.xlu0 %177
    %v179 = vmax.f32 %v178, 1e-09
    %v180 = vrcp.pop %v179
    %v182 = vrot.slane %v180, 1
    %v185 = vmul.f32 %v156, %v180
    %v186 = vmul.f32 %v157, %v182
    %v187 = vmul.f32 %v185, %v185
    %v188 = vmul.f32 %v186, %v186
    %v191 = vrot.slane %v188, 7
    %v192 = vsel %vm172, %v191, %v187
    %vm194 = vcmask 254976
    %v195 = vsel %vm194, %v192, 0.0
    %196 = vadd.xlane.f32.xlu0 %v195
    %v197 = vpop.xlane.xlu0 %196
    %v198 = vmax.f32 %v197, 1e-24
    %v199 = vrsqrt.pop %v198
    %v201 = vrot.slane %v199, 1
    %v204 = vmul.f32 %v185, %v199
    %v205 = vmul.f32 %v186, %v201
    %v206 = vld [vmem:[#allocation2] sm:$0xf]
    %v207 = vld [vmem:[#allocation2 + $0x4] sm:$0xf]
    %v208 = vld [vmem:[%s3] sm:$0x1]
    %v209 = vld [vmem:[%s3 + $0x1] sm:$0x1]
    %v211 = vsel %vm62, %v208, 0
    %v214 = vsel %vm66, %v206, 0
    %216 = vmatprep.subr.bf16.mxu0 0
    %217 = vmatpush1.bf16.msra.mxu0 0
    %218 = vmatprep.subr.bf16.mxu0 0
    %219 = vmatpush1.bf16.msra.mxu0 0
    %220 = vmatprep.subr.bf16.mxu0 0
    %221 = vmatpush1.bf16.msra.mxu0 0
    %222 = vmatprep.subr.bf16.mxu0 0
    %223 = vmatpush1.bf16.msra.mxu0 0
    %224 = vmatprep.subr.bf16.mxu0 0
    %225 = vmatpush1.bf16.msra.mxu0 0
    %226 = vmatprep.subr.bf16.mxu0 0
    %227 = vmatpush1.bf16.msra.mxu0 0
    %228 = vmatprep.subr.bf16.mxu0 0
    %229 = vmatpush1.bf16.msra.mxu0 0
    %230 = vmatprep.subr.bf16.mxu0 0
    %231 = vmatpush1.bf16.msra.mxu0 %v214
    %232 = vmatprep.subr.bf16.mxu0 0
    %233 = vmatpush2.bf16.msra.mxu0 0
    %234 = vmatprep.subr.bf16.mxu0 0
    %235 = vmatpush2.bf16.msra.mxu0 0
    %236 = vmatprep.subr.bf16.mxu0 0
    %237 = vmatpush2.bf16.msra.mxu0 0
    %238 = vmatprep.subr.bf16.mxu0 0
    %239 = vmatpush2.bf16.msra.mxu0 0
    %240 = vmatprep.subr.bf16.mxu0 0
    %241 = vmatpush2.bf16.msra.mxu0 0
    %242 = vmatprep.subr.bf16.mxu0 0
    %243 = vmatpush2.bf16.msra.mxu0 0
    %244 = vmatprep.subr.bf16.mxu0 0
    %245 = vmatpush2.bf16.msra.mxu0 0
    %246 = vmatprep.subr.bf16.mxu0 0
    %247 = vmatpush2.bf16.msra.mxu0 0
    %248 = vmatprep.mubr.bf16.mxu0 0
    %249 = vmatmul.mubr.bf16.gmra.mxu0 %v211
    %v250 = vpop.f32.mrf.mxu0
    %v251 = vadd.f32 0.0, %v250
    %v252 = vpop.f32.mrf.mxu0
    %v253 = vpop.f32.mrf.mxu0
    %v254 = vpop.f32.mrf.mxu0
    %255 = vdwg.mxu0
    %v257 = vsel %vm62, %v209, 0
    %v260 = vsel %vm66, %v207, 0
    %262 = vmatprep.subr.bf16.mxu0 0
    %263 = vmatpush1.bf16.msra.mxu0 0
    %264 = vmatprep.subr.bf16.mxu0 0
    %265 = vmatpush1.bf16.msra.mxu0 0
    %266 = vmatprep.subr.bf16.mxu0 0
    %267 = vmatpush1.bf16.msra.mxu0 0
    %268 = vmatprep.subr.bf16.mxu0 0
    %269 = vmatpush1.bf16.msra.mxu0 0
    %270 = vmatprep.subr.bf16.mxu0 0
    %271 = vmatpush1.bf16.msra.mxu0 0
    %272 = vmatprep.subr.bf16.mxu0 0
    %273 = vmatpush1.bf16.msra.mxu0 0
    %274 = vmatprep.subr.bf16.mxu0 0
    %275 = vmatpush1.bf16.msra.mxu0 0
    %276 = vmatprep.subr.bf16.mxu0 0
    %277 = vmatpush1.bf16.msra.mxu0 %v260
    %278 = vmatprep.subr.bf16.mxu0 0
    %279 = vmatpush2.bf16.msra.mxu0 0
    %280 = vmatprep.subr.bf16.mxu0 0
    %281 = vmatpush2.bf16.msra.mxu0 0
    %282 = vmatprep.subr.bf16.mxu0 0
    %283 = vmatpush2.bf16.msra.mxu0 0
    %284 = vmatprep.subr.bf16.mxu0 0
    %285 = vmatpush2.bf16.msra.mxu0 0
    %286 = vmatprep.subr.bf16.mxu0 0
    %287 = vmatpush2.bf16.msra.mxu0 0
    %288 = vmatprep.subr.bf16.mxu0 0
    %289 = vmatpush2.bf16.msra.mxu0 0
    %290 = vmatprep.subr.bf16.mxu0 0
    %291 = vmatpush2.bf16.msra.mxu0 0
    %292 = vmatprep.subr.bf16.mxu0 0
    %293 = vmatpush2.bf16.msra.mxu0 0
    %294 = vmatprep.mubr.bf16.mxu0 0
    %295 = vmatmul.mubr.bf16.gmra.mxu0 %v257
    %v296 = vpop.f32.mrf.mxu0
    %v297 = vadd.f32 0.0, %v296
    %v298 = vpop.f32.mrf.mxu0
    %v299 = vpop.f32.mrf.mxu0
    %v300 = vpop.f32.mrf.mxu0
    %301 = vdwg.mxu0
    %v302 = vadd.f32 %v251, 0.0
    %v303 = vadd.f32 %v297, 0.0
    %v304 = vunpack.c.l.bf16 %v208
    %v305 = vunpack.c.l.bf16 %v209
    %v306 = vadd.f32 %v304, 0.0
    %v307 = vadd.f32 %v305, 0.0
    %v310 = vlaneseq
    %v311 = vshrl.u32 %v310, 7
    %v312 = vsub.s32 0, %v311
    %v313 = vrot.slane %v306, %v312
    %v314 = vlaneseq
    %v315 = vshrl.u32 %v314, 7
    %v316 = vsub.s32 0, %v315
    %v317 = vrot.slane %v307, %v316
    %v318 = vsel %vm172, %v317, %v313
    %v320 = vsel %vm175, %v318, 0.0
    %321 = vadd.xlane.f32.xlu0 %v320
    %v322 = vpop.xlane.xlu0 %321
    %v323 = vmax.f32 %v322, 1e-09
    %v324 = vrcp.pop %v323
    %v326 = vrot.slane %v324, 1
    %v329 = vmul.f32 %v302, %v324
    %v330 = vmul.f32 %v303, %v326
    %v331 = vmul.f32 %v329, %v329
    %v332 = vmul.f32 %v330, %v330
    %v335 = vrot.slane %v332, 7
    %v336 = vsel %vm172, %v335, %v331
    %v338 = vsel %vm194, %v336, 0.0
    %339 = vadd.xlane.f32.xlu0 %v338
    %v340 = vpop.xlane.xlu0 %339
    %v341 = vmax.f32 %v340, 1e-24
    %v342 = vrsqrt.pop %v341
    %v344 = vrot.slane %v342, 1
    %v347 = vmul.f32 %v329, %v342
    %v348 = vmul.f32 %v330, %v344
    %v349 = vld [vmem:[#allocation5] sm:$0xff]
    %v350 = vld [vmem:[#allocation5 + $0x8] sm:$0xff]
    %v351 = vld [vmem:[#allocation5 + $0x10] sm:$0xff]
    %v352 = vld [vmem:[#allocation5 + $0x18] sm:$0xff]
    %v353 = vld [vmem:[#allocation5 + $0x20] sm:$0xff]
    %v354 = vld [vmem:[#allocation5 + $0x28] sm:$0xff]
    %v355 = vld [vmem:[#allocation5 + $0x30] sm:$0xff]
    %v356 = vld [vmem:[#allocation5 + $0x38] sm:$0xff]
    %v359 = vrot.slane %v348, 7
    %v360 = vsel %vm172, %v359, %v347
    %vm361 = vcmask 261120
    %v362 = vsel %vm361, %v360, 0
    %364 = vmatprep.subr.mxu0 0.0
    %365 = vmatpush1.msra.mxu0 0.0
    %366 = vmatprep.subr.mxu0 0.0
    %367 = vmatpush1.msra.mxu0 0.0
    %368 = vmatprep.subr.mxu0 0.0
    %369 = vmatpush1.msra.mxu0 0.0
    %370 = vmatprep.subr.mxu0 0.0
    %371 = vmatpush1.msra.mxu0 0.0
    %372 = vmatprep.subr.mxu0 0.0
    %373 = vmatpush1.msra.mxu0 0.0
    %374 = vmatprep.subr.mxu0 0.0
    %375 = vmatpush1.msra.mxu0 0.0
    %376 = vmatprep.subr.mxu0 0.0
    %377 = vmatpush1.msra.mxu0 0.0
    %378 = vmatprep.subr.mxu0 0.0
    %379 = vmatpush1.msra.mxu0 0.0
    %380 = vmatprep.subr.mxu0 0.0
    %381 = vmatpush1.msra.mxu0 0.0
    %382 = vmatprep.subr.mxu0 0.0
    %383 = vmatpush1.msra.mxu0 0.0
    %384 = vmatprep.subr.mxu0 0.0
    %385 = vmatpush1.msra.mxu0 0.0
    %386 = vmatprep.subr.mxu0 0.0
    %387 = vmatpush1.msra.mxu0 0.0
    %388 = vmatprep.subr.mxu0 0.0
    %389 = vmatpush1.msra.mxu0 %v356
    %390 = vmatprep.subr.mxu0 0.0
    %391 = vmatpush1.msra.mxu0 %v355
    %392 = vmatprep.subr.mxu0 0.0
    %393 = vmatpush1.msra.mxu0 %v354
    %394 = vmatprep.subr.mxu0 0.0
    %395 = vmatpush1.msra.mxu0 %v353
    %396 = vmatprep.subr.mxu0 0.0
    %397 = vmatpush2.msra.mxu0 0.0
    %398 = vmatprep.subr.mxu0 0.0
    %399 = vmatpush2.msra.mxu0 0.0
    %400 = vmatprep.subr.mxu0 0.0
    %401 = vmatpush2.msra.mxu0 0.0
    %402 = vmatprep.subr.mxu0 0.0
    %403 = vmatpush2.msra.mxu0 0.0
    %404 = vmatprep.subr.mxu0 0.0
    %405 = vmatpush2.msra.mxu0 0.0
    %406 = vmatprep.subr.mxu0 0.0
    %407 = vmatpush2.msra.mxu0 0.0
    %408 = vmatprep.subr.mxu0 0.0
    %409 = vmatpush2.msra.mxu0 0.0
    %410 = vmatprep.subr.mxu0 0.0
    %411 = vmatpush2.msra.mxu0 0.0
    %412 = vmatprep.subr.mxu0 0.0
    %413 = vmatpush2.msra.mxu0 0.0
    %414 = vmatprep.subr.mxu0 0.0
    %415 = vmatpush2.msra.mxu0 0.0
    %416 = vmatprep.subr.mxu0 0.0
    %417 = vmatpush2.msra.mxu0 0.0
    %418 = vmatprep.subr.mxu0 0.0
    %419 = vmatpush2.msra.mxu0 0.0
    %420 = vmatprep.subr.mxu0 0.0
    %421 = vmatpush2.msra.mxu0 0.0
    %422 = vmatprep.subr.mxu0 0.0
    %423 = vmatpush2.msra.mxu0 0.0
    %424 = vmatprep.subr.mxu0 0.0
    %425 = vmatpush2.msra.mxu0 0.0
    %426 = vmatprep.subr.mxu0 0.0
    %427 = vmatpush2.msra.mxu0 0.0
    %428 = vmatprep.mubr.f32.mxu0 0.0
    %429 = vmatmul.mubr.f32.gmra.mxu0 %v362
    %v430 = vpop.f32.mrf.mxu0
    %v431 = vadd.f32 0.0, %v430
    %v432 = vpop.f32.mrf.mxu0
    %433 = vdwg.mxu0
    %v436 = vrot.slane %v205, 7
    %v437 = vsel %vm172, %v436, %v204
    %v438 = vsel %vm361, %v437, 0
    %440 = vmatprep.subr.mxu0 0.0
    %441 = vmatpush1.msra.mxu0 0.0
    %442 = vmatprep.subr.mxu0 0.0
    %443 = vmatpush1.msra.mxu0 0.0
    %444 = vmatprep.subr.mxu0 0.0
    %445 = vmatpush1.msra.mxu0 0.0
    %446 = vmatprep.subr.mxu0 0.0
    %447 = vmatpush1.msra.mxu0 0.0
    %448 = vmatprep.subr.mxu0 0.0
    %449 = vmatpush1.msra.mxu0 0.0
    %450 = vmatprep.subr.mxu0 0.0
    %451 = vmatpush1.msra.mxu0 0.0
    %452 = vmatprep.subr.mxu0 0.0
    %453 = vmatpush1.msra.mxu0 0.0
    %454 = vmatprep.subr.mxu0 0.0
    %455 = vmatpush1.msra.mxu0 0.0
    %456 = vmatprep.subr.mxu0 0.0
    %457 = vmatpush1.msra.mxu0 0.0
    %458 = vmatprep.subr.mxu0 0.0
    %459 = vmatpush1.msra.mxu0 0.0
    %460 = vmatprep.subr.mxu0 0.0
    %461 = vmatpush1.msra.mxu0 0.0
    %462 = vmatprep.subr.mxu0 0.0
    %463 = vmatpush1.msra.mxu0 0.0
    %464 = vmatprep.subr.mxu0 0.0
    %465 = vmatpush1.msra.mxu0 %v352
    %466 = vmatprep.subr.mxu0 0.0
    %467 = vmatpush1.msra.mxu0 %v351
    %468 = vmatprep.subr.mxu0 0.0
    %469 = vmatpush1.msra.mxu0 %v350
    %470 = vmatprep.subr.mxu0 0.0
    %471 = vmatpush1.msra.mxu0 %v349
    %472 = vmatprep.subr.mxu0 0.0
    %473 = vmatpush2.msra.mxu0 0.0
    %474 = vmatprep.subr.mxu0 0.0
    %475 = vmatpush2.msra.mxu0 0.0
    %476 = vmatprep.subr.mxu0 0.0
    %477 = vmatpush2.msra.mxu0 0.0
    %478 = vmatprep.subr.mxu0 0.0
    %479 = vmatpush2.msra.mxu0 0.0
    %480 = vmatprep.subr.mxu0 0.0
    %481 = vmatpush2.msra.mxu0 0.0
    %482 = vmatprep.subr.mxu0 0.0
    %483 = vmatpush2.msra.mxu0 0.0
    %484 = vmatprep.subr.mxu0 0.0
    %485 = vmatpush2.msra.mxu0 0.0
    %486 = vmatprep.subr.mxu0 0.0
    %487 = vmatpush2.msra.mxu0 0.0
    %488 = vmatprep.subr.mxu0 0.0
    %489 = vmatpush2.msra.mxu0 0.0
    %490 = vmatprep.subr.mxu0 0.0
    %491 = vmatpush2.msra.mxu0 0.0
    %492 = vmatprep.subr.mxu0 0.0
    %493 = vmatpush2.msra.mxu0 0.0
    %494 = vmatprep.subr.mxu0 0.0
    %495 = vmatpush2.msra.mxu0 0.0
    %496 = vmatprep.subr.mxu0 0.0
    %497 = vmatpush2.msra.mxu0 0.0
    %498 = vmatprep.subr.mxu0 0.0
    %499 = vmatpush2.msra.mxu0 0.0
    %500 = vmatprep.subr.mxu0 0.0
    %501 = vmatpush2.msra.mxu0 0.0
    %502 = vmatprep.subr.mxu0 0.0
    %503 = vmatpush2.msra.mxu0 0.0
    %504 = vmatprep.mubr.f32.mxu0 0.0
    %505 = vmatmul.mubr.f32.gmra.mxu0 %v438
    %v506 = vpop.f32.mrf.mxu0
    %v507 = vadd.f32 %v431, %v506
    %v508 = vpop.f32.mrf.mxu0
    %509 = vdwg.mxu0
    %v510 = vsub.f32 %v204, %v347
    %v511 = vsub.f32 %v205, %v348
    %v512 = vand.u32 2147483647, %v510
    %v513 = vand.u32 2147483647, %v511
    %v514 = vld [vmem:[#allocation5 + $0x40] sm:$0xff]
    %v515 = vld [vmem:[#allocation5 + $0x48] sm:$0xff]
    %v516 = vld [vmem:[#allocation5 + $0x50] sm:$0xff]
    %v517 = vld [vmem:[#allocation5 + $0x58] sm:$0xff]
    %v520 = vrot.slane %v513, 7
    %v521 = vsel %vm172, %v520, %v512
    %v522 = vsel %vm361, %v521, 0
    %524 = vmatprep.subr.mxu0 0.0
    %525 = vmatpush1.msra.mxu0 0.0
    %526 = vmatprep.subr.mxu0 0.0
    %527 = vmatpush1.msra.mxu0 0.0
    %528 = vmatprep.subr.mxu0 0.0
    %529 = vmatpush1.msra.mxu0 0.0
    %530 = vmatprep.subr.mxu0 0.0
    %531 = vmatpush1.msra.mxu0 0.0
    %532 = vmatprep.subr.mxu0 0.0
    %533 = vmatpush1.msra.mxu0 0.0
    %534 = vmatprep.subr.mxu0 0.0
    %535 = vmatpush1.msra.mxu0 0.0
    %536 = vmatprep.subr.mxu0 0.0
    %537 = vmatpush1.msra.mxu0 0.0
    %538 = vmatprep.subr.mxu0 0.0
    %539 = vmatpush1.msra.mxu0 0.0
    %540 = vmatprep.subr.mxu0 0.0
    %541 = vmatpush1.msra.mxu0 0.0
    %542 = vmatprep.subr.mxu0 0.0
    %543 = vmatpush1.msra.mxu0 0.0
    %544 = vmatprep.subr.mxu0 0.0
    %545 = vmatpush1.msra.mxu0 0.0
    %546 = vmatprep.subr.mxu0 0.0
    %547 = vmatpush1.msra.mxu0 0.0
    %548 = vmatprep.subr.mxu0 0.0
    %549 = vmatpush1.msra.mxu0 %v517
    %550 = vmatprep.subr.mxu0 0.0
    %551 = vmatpush1.msra.mxu0 %v516
    %552 = vmatprep.subr.mxu0 0.0
    %553 = vmatpush1.msra.mxu0 %v515
    %554 = vmatprep.subr.mxu0 0.0
    %555 = vmatpush1.msra.mxu0 %v514
    %556 = vmatprep.subr.mxu0 0.0
    %557 = vmatpush2.msra.mxu0 0.0
    %558 = vmatprep.subr.mxu0 0.0
    %559 = vmatpush2.msra.mxu0 0.0
    %560 = vmatprep.subr.mxu0 0.0
    %561 = vmatpush2.msra.mxu0 0.0
    %562 = vmatprep.subr.mxu0 0.0
    %563 = vmatpush2.msra.mxu0 0.0
    %564 = vmatprep.subr.mxu0 0.0
    %565 = vmatpush2.msra.mxu0 0.0
    %566 = vmatprep.subr.mxu0 0.0
    %567 = vmatpush2.msra.mxu0 0.0
    %568 = vmatprep.subr.mxu0 0.0
    %569 = vmatpush2.msra.mxu0 0.0
    %570 = vmatprep.subr.mxu0 0.0
    %571 = vmatpush2.msra.mxu0 0.0
    %572 = vmatprep.subr.mxu0 0.0
    %573 = vmatpush2.msra.mxu0 0.0
    %574 = vmatprep.subr.mxu0 0.0
    %575 = vmatpush2.msra.mxu0 0.0
    %576 = vmatprep.subr.mxu0 0.0
    %577 = vmatpush2.msra.mxu0 0.0
    %578 = vmatprep.subr.mxu0 0.0
    %579 = vmatpush2.msra.mxu0 0.0
    %580 = vmatprep.subr.mxu0 0.0
    %581 = vmatpush2.msra.mxu0 0.0
    %582 = vmatprep.subr.mxu0 0.0
    %583 = vmatpush2.msra.mxu0 0.0
    %584 = vmatprep.subr.mxu0 0.0
    %585 = vmatpush2.msra.mxu0 0.0
    %586 = vmatprep.subr.mxu0 0.0
    %587 = vmatpush2.msra.mxu0 0.0
    %588 = vmatprep.mubr.f32.mxu0 0.0
    %589 = vmatmul.mubr.f32.gmra.mxu0 %v522
    %v590 = vpop.f32.mrf.mxu0
    %v591 = vadd.f32 0.0, %v590
    %v592 = vpop.f32.mrf.mxu0
    %593 = vdwg.mxu0
    %v594 = vadd.f32 %v507, %v591
    %v595 = vld [vmem:[%s5] sm:$0x1]
    %v597 = vlaneseq
    %v598 = vshrl.u32 %v597, 7
    %v599 = vsub.s32 0, %v598
    %v600 = vrot.slane %v595, %v599
    %v602 = vadd.f32 %v594, %v600
    %603 = vst [vmem:[#allocation7] sm:$0x3] %v602
    %v604 = vlaneseq
    %v605 = vand.u32 %v604, 127
    %vm606 = vcmp.lt.s32.totalorder %v605, 2
    %v607 = vsel %vm606, %v602, -1e+30
    %vm608 = vcmask 1041408
    %v609 = vsel %vm608, %v607, -inf
    %610 = vmax.xlane.f32.xlu0 %v609
    %v611 = vpop.xlane.xlu0 %610
    %v612 = vsub.f32 %v607, %v611
    %v613 = vmul.f32 %v612, 1.442695
    %v614 = vpow.pop %v613
    %v615 = vsel %vm608, %v614, 0.0
    %616 = vadd.xlane.f32.xlu0 %v615
    %v617 = vpop.xlane.xlu0 %616
    %v618 = vlog2.pop %v617
    %v619 = vmul.f32 %v618, 0.6931472
    %v620 = vadd.f32 %v619, %v611
    %v621 = vld [vmem:[%s6] sm:$0x3]
    %622 = vset.pattern.permute.xlu0 0
    %623 = vperm.xlu0 %622, %v621
    %v624 = vpop.permute.xlu0 %623
    %vm625 = vcmp.eq.s32.totalorder %v605, %v624
    %v626 = vsel %vm625, 1, 0
    %v627 = vcvt.s32.f32 %v626
    %v628 = vmul.f32 %v602, %v627
    %v629 = vsel %vm608, %v628, 0.0
    %630 = vadd.xlane.f32.xlu0 %v629
    %v631 = vpop.xlane.xlu0 %630
    %v632 = vsub.f32 %v620, %v631
    %vm633 = vcmask 1024
    %634 = vst.msk [vmem:[%s8] sm:$0x3] %vm633, %v632
    // Predicated region
    $region38: #{tpu_custom_call.1} parent=1 // pred_check
      _
    $region39: #{tpu_custom_call.1} parent=1 // pred_check_branch
      %636 = sbr.rel (0) target = $region41
    $region40: #{tpu_custom_call.1} parent=1 // pred_region
      %s638 = ssub.s32 32, 32
      %639 = vsyncadd [#allocation4], %s638
      %s641 = sshll.u32 [#allocation7], 4
      %s642 = int_to_ptr.vmem [resolvable:$true] %s641
      %644 = dma.vmem_to_hbm [thread:$0]  %s642, 32, %s7, [#allocation4]
    $region41: #{tpu_custom_call.1} parent=1 // pred_fallthru
      _
    // Predicated region
    $region42: #{tpu_custom_call.1} parent=1 // pred_check
      _
    $region43: #{tpu_custom_call.1} parent=1 // pred_check_branch
      %646 = sbr.rel (0) target = $region45
    $region44: #{tpu_custom_call.1} parent=1 // pred_region
      _
    $region45: #{tpu_custom_call.1} parent=1 // pred_fallthru
      _
    // Predicated region
    $region46: #{tpu_custom_call.1} parent=1 // pred_check
      _
    $region47: #{tpu_custom_call.1} parent=1 // pred_check_branch
      %648 = sbr.rel (0) target = $region49
    $region48: #{tpu_custom_call.1} parent=1 // pred_region
      %649 = dma.done [#allocation4], 32
    $region49: #{tpu_custom_call.1} parent=1 // pred_fallthru
      _
    // Predicated region
    $region50: #{tpu_custom_call.1} parent=1 // pred_check
      _
    $region51: #{tpu_custom_call.1} parent=1 // pred_check_branch
      %651 = sbr.rel (0) target = $region53
    $region52: #{tpu_custom_call.1} parent=1 // pred_region
      _
    $region53: #{tpu_custom_call.1} parent=1 // pred_fallthru
      _
    %652 = vsyncpa [#allocation3], 1
    %653 = vsyncpa [#allocation6], 1
    %654 = vsyncpa [#allocation4], 1

</llo_original>
